<compile_context>
chip_gen: v7x
topology: tpu7x:2x2x1
jax: 0.10.0
libtpu: 0.0.40
codegen_flags: <defaults>
</compile_context>

<pallas_src>
import jax
import jax.numpy as jnp
from jax.experimental import pallas as pl
from jax.experimental.pallas import tpu as pltpu


# Below this table size we gather with a VPU select chain; above it we fall
# back to a one-hot @ table matmul on the MXU.
_SELECT_MAX_ENVS = 32


def _round_up(x: int, m: int) -> int:
    return ((x + m - 1) // m) * m


def ebd_kernel(idx_ref, w_ref, out_ref):
    """Gather rows of the embedding table for one batch tile.

    idx_ref: VMEM (tb, 1) int32            — environment ids for this tile
    w_ref  : VMEM (envs_num, num_classes)  — full table, resident across steps
    out_ref: VMEM (tb, num_classes)        — gathered rows (the size-1 middle
                                             axis of the (B,1,C) output is
                                             squeezed by the BlockSpec)
    """
    envs_num, _ = w_ref.shape
    idx = idx_ref[...]                        # (tb, 1)

    if envs_num <= _SELECT_MAX_ENVS:
        # VPU select chain: bit-exact row gather, no MXU involvement.
        # Out-of-range ids fall through to the zero init.
        w = w_ref[...]                        # (envs_num, num_classes)
        acc = jnp.zeros(out_ref.shape, out_ref.dtype)
        for k in range(envs_num):             # envs_num is tiny & static
            acc = jnp.where(idx == k, w[k][None, :], acc)
        out_ref[...] = acc
    else:
        # Fallback for larger tables: one-hot @ table on the MXU.  The batch
        # tile is capped in the wrapper so the (tb, envs_num) one-hot stays
        # small; bad ids yield all-zero rows.
        tb = out_ref.shape[0]
        env_iota = jax.lax.broadcasted_iota(jnp.int32, (tb, envs_num), 1)
        one_hot = (idx == env_iota).astype(w_ref.dtype)
        out_ref[...] = jnp.dot(
            one_hot, w_ref[...], preferred_element_type=jnp.float32
        ).astype(out_ref.dtype)
        # TODO(synk): for very large tables (envs_num >> few hundred) a
        # scalar-prefetch / DMA row-gather would beat the one-hot matmul, and
        # on v7x the table should be single-buffered / tiled over num_classes.


def ebd_forward(e, weight, block_b: int = 1024):
    """Pallas equivalent of EBD.forward: weight[e.long()][:, None, :]."""
    B = e.shape[0]
    envs_num, num_classes = weight.shape
    dt = jnp.dtype(weight.dtype)

    # Sublane multiple for the output tile (f32 -> 8, bf16 -> 16, int8 -> 32).
    sublane = max(8, 32 // dt.itemsize)

    # Keep the materialized one-hot bounded on the MXU fallback path.
    if envs_num > _SELECT_MAX_ENVS:
        block_b = min(block_b, 256)

    # Balanced grid: the last step is never mostly padding, and mid/large
    # batches get >= 2 steps so ("parallel",) can use both v7x TensorCores.
    num_steps = pl.cdiv(B, block_b)
    if num_steps < 2 and B >= 512:
        num_steps = 2
    tb = _round_up(pl.cdiv(B, num_steps), sublane)
    grid = (pl.cdiv(B, tb),)

    idx = e.astype(jnp.int32).reshape(B, 1)

    bytes_accessed = (
        B * 4                                    # indices
        + B * num_classes * dt.itemsize          # gathered output
        + envs_num * num_classes * dt.itemsize   # table (resident in VMEM)
    )
    flops = 0 if envs_num <= _SELECT_MAX_ENVS else 2 * B * envs_num * num_classes

    return pl.pallas_call(
        ebd_kernel,
        out_shape=jax.ShapeDtypeStruct((B, 1, num_classes), weight.dtype),
        grid=grid,
        in_specs=[
            pl.BlockSpec((tb, 1), lambda i: (i, 0)),                  # env ids
            pl.BlockSpec((envs_num, num_classes), lambda i: (0, 0)),  # table
        ],
        # Size-1 middle axis is squeezed from the kernel view; last grid step
        # may be a partial block (masked writeback).
        out_specs=pl.BlockSpec((tb, None, num_classes), lambda i: (i, 0, 0)),
        compiler_params=pltpu.CompilerParams(
            dimension_semantics=("parallel",),
        ),
        cost_estimate=pl.CostEstimate(
            flops=flops, transcendentals=0, bytes_accessed=bytes_accessed
        ),
    )(idx, weight)


if __name__ == "__main__":
    envs_num = 4
    num_classes = 10

    key = jax.random.PRNGKey(0)
    k_noise, k_idx, k_idx2, k_idx3 = jax.random.split(key, 4)

    # Parameter init mirroring EBD.re_init_with_noise(0.1): 1.0 + N(0, 0.1).
    weight = (1.0 + 0.1 * jax.random.normal(
        k_noise, (envs_num, num_classes))).astype(jnp.float32)

    # 1) Small batch, single full block.
    e = jax.random.randint(k_idx, (8,), 0, envs_num, dtype=jnp.int32)
    out = jax.block_until_ready(ebd_forward(e, weight))
    ref = weight[e][:, None, :]
    assert out.shape == (8, 1, num_classes)
    assert out.dtype == weight.dtype
    assert jnp.array_equal(out, ref), "EBD mismatch (small batch)"

    # 2) Batch not a multiple of the tile -> partial (masked) last block.
    e2 = jax.random.randint(k_idx2, (300,), 0, envs_num, dtype=jnp.int32)
    out2 = jax.block_until_ready(ebd_forward(e2, weight))
    ref2 = weight[e2][:, None, :]
    assert out2.shape == (300, 1, num_classes)
    assert jnp.array_equal(out2, ref2), "EBD mismatch (partial block)"

    # 3) bf16 table exercises the dtype-aware sublane rounding.
    w_bf16 = weight.astype(jnp.bfloat16)
    e3 = jax.random.randint(k_idx3, (5,), 0, envs_num, dtype=jnp.int32)
    out3 = jax.block_until_ready(ebd_forward(e3, w_bf16))
    ref3 = w_bf16[e3][:, None, :]
    assert out3.shape == (5, 1, num_classes)
    assert out3.dtype == jnp.bfloat16
    assert jnp.array_equal(out3, ref3), "EBD mismatch (bf16)"

    print("KERNEL_OK")
</pallas_src>

<mosaic_0001>
module attributes {stable_mosaic.version = 11 : i64} {
  func.func @ebd_kernel(%arg0: i32, %arg1: memref<8x1xi32, #tpu.memory_space<vmem>>, %arg2: memref<4x10xf32, #tpu.memory_space<vmem>>, %arg3: memref<8x1x10xf32, #tpu.memory_space<vmem>>) attributes {dimension_semantics = [#tpu.dimension_semantics<parallel>], iteration_bounds = array<i64: 1>, scalar_prefetch = 0 : i64, scratch_operands = 0 : i64, tpu.core_type = #tpu.core_type<tc>, window_params = [{transform_indices = @transform_0, window_bounds = array<i64: 8, 1>}, {pipeline_mode = #tpu.pipeline_mode<synchronous>, transform_indices = @transform_1, window_bounds = array<i64: 4, 10>}, {transform_indices = @transform_2, window_bounds = array<i64: 8, 1, 10>}]} {
    %c0 = arith.constant 0 : index
    %c0_0 = arith.constant 0 : index
    %0 = vector.load %arg1[%c0, %c0_0] : memref<8x1xi32, #tpu.memory_space<vmem>>, vector<8x1xi32>
    %c0_1 = arith.constant 0 : index
    %c0_2 = arith.constant 0 : index
    %1 = vector.load %arg2[%c0_1, %c0_2] : memref<4x10xf32, #tpu.memory_space<vmem>>, vector<4x10xf32>
    %cst = arith.constant 0.000000e+00 : f32
    %2 = vector.broadcast %cst : f32 to vector<8x10xf32>
    %c0_i32 = arith.constant 0 : i32
    %3 = vector.broadcast %c0_i32 : i32 to vector<8x1xi32>
    %4 = arith.cmpi eq, %0, %3 : vector<8x1xi32>
    %5 = vector.extract_strided_slice %1 {offsets = [0, 0], sizes = [1, 10], strides = [1, 1]} : vector<4x10xf32> to vector<1x10xf32>
    %6 = vector.shape_cast %5 : vector<1x10xf32> to vector<10xf32>
    %7 = vector.shape_cast %6 : vector<10xf32> to vector<1x10xf32>
    %8 = vector.shape_cast %4 : vector<8x1xi1> to vector<8x1xi1>
    %9 = vector.broadcast %8 : vector<8x1xi1> to vector<8x10xi1>
    %10 = vector.shape_cast %7 : vector<1x10xf32> to vector<1x10xf32>
    %11 = vector.broadcast %10 : vector<1x10xf32> to vector<8x10xf32>
    %12 = arith.select %9, %11, %2 : vector<8x10xi1>, vector<8x10xf32>
    %c1_i32 = arith.constant 1 : i32
    %13 = vector.broadcast %c1_i32 : i32 to vector<8x1xi32>
    %14 = arith.cmpi eq, %0, %13 : vector<8x1xi32>
    %15 = vector.extract_strided_slice %1 {offsets = [1, 0], sizes = [1, 10], strides = [1, 1]} : vector<4x10xf32> to vector<1x10xf32>
    %16 = vector.shape_cast %15 : vector<1x10xf32> to vector<10xf32>
    %17 = vector.shape_cast %16 : vector<10xf32> to vector<1x10xf32>
    %18 = vector.shape_cast %14 : vector<8x1xi1> to vector<8x1xi1>
    %19 = vector.broadcast %18 : vector<8x1xi1> to vector<8x10xi1>
    %20 = vector.shape_cast %17 : vector<1x10xf32> to vector<1x10xf32>
    %21 = vector.broadcast %20 : vector<1x10xf32> to vector<8x10xf32>
    %22 = arith.select %19, %21, %12 : vector<8x10xi1>, vector<8x10xf32>
    %c2_i32 = arith.constant 2 : i32
    %23 = vector.broadcast %c2_i32 : i32 to vector<8x1xi32>
    %24 = arith.cmpi eq, %0, %23 : vector<8x1xi32>
    %25 = vector.extract_strided_slice %1 {offsets = [2, 0], sizes = [1, 10], strides = [1, 1]} : vector<4x10xf32> to vector<1x10xf32>
    %26 = vector.shape_cast %25 : vector<1x10xf32> to vector<10xf32>
    %27 = vector.shape_cast %26 : vector<10xf32> to vector<1x10xf32>
    %28 = vector.shape_cast %24 : vector<8x1xi1> to vector<8x1xi1>
    %29 = vector.broadcast %28 : vector<8x1xi1> to vector<8x10xi1>
    %30 = vector.shape_cast %27 : vector<1x10xf32> to vector<1x10xf32>
    %31 = vector.broadcast %30 : vector<1x10xf32> to vector<8x10xf32>
    %32 = arith.select %29, %31, %22 : vector<8x10xi1>, vector<8x10xf32>
    %c3_i32 = arith.constant 3 : i32
    %33 = vector.broadcast %c3_i32 : i32 to vector<8x1xi32>
    %34 = arith.cmpi eq, %0, %33 : vector<8x1xi32>
    %35 = vector.extract_strided_slice %1 {offsets = [3, 0], sizes = [1, 10], strides = [1, 1]} : vector<4x10xf32> to vector<1x10xf32>
    %36 = vector.shape_cast %35 : vector<1x10xf32> to vector<10xf32>
    %37 = vector.shape_cast %36 : vector<10xf32> to vector<1x10xf32>
    %38 = vector.shape_cast %34 : vector<8x1xi1> to vector<8x1xi1>
    %39 = vector.broadcast %38 : vector<8x1xi1> to vector<8x10xi1>
    %40 = vector.shape_cast %37 : vector<1x10xf32> to vector<1x10xf32>
    %41 = vector.broadcast %40 : vector<1x10xf32> to vector<8x10xf32>
    %42 = arith.select %39, %41, %32 : vector<8x10xi1>, vector<8x10xf32>
    %c0_3 = arith.constant 0 : index
    %c0_4 = arith.constant 0 : index
    %c0_5 = arith.constant 0 : index
    %43 = vector.load %arg3[%c0_3, %c0_4, %c0_5] : memref<8x1x10xf32, #tpu.memory_space<vmem>>, vector<8x1x10xf32>
    %44 = vector.shape_cast %43 : vector<8x1x10xf32> to vector<8x10xf32>
    %45 = vector.shape_cast %42 : vector<8x10xf32> to vector<8x1x10xf32>
    tpu.vector_store %arg3[%c0_3, %c0_4, %c0_5], %45 {strides = array<i32>} : memref<8x1x10xf32, #tpu.memory_space<vmem>>, vector<8x1x10xf32>,
    return
  }
  func.func @transform_0(%arg0: i32) -> (i32, i32) {
    %c0_i32 = arith.constant 0 : i32
    %c0_i32_0 = arith.constant 0 : i32
    return %arg0, %c0_i32 : i32, i32
  }
  func.func @transform_1(%arg0: i32) -> (i32, i32) {
    %c0_i32 = arith.constant 0 : i32
    %c0_i32_0 = arith.constant 0 : i32
    %c0_i32_1 = arith.constant 0 : i32
    return %c0_i32, %c0_i32_0 : i32, i32
  }
  func.func @transform_2(%arg0: i32) -> (i32, i32, i32) {
    %c0_i32 = arith.constant 0 : i32
    %c0_i32_0 = arith.constant 0 : i32
    %c0_i32_1 = arith.constant 0 : i32
    return %arg0, %c0_i32, %c0_i32_0 : i32, i32, i32
  }
}

</mosaic_0001>

<llo_original>
// kernel: tpu_custom_call.1
$region0: #{tpu_custom_call.1}
  #allocation0 [shape = 'u32[]', space=smem, size = 0x4, offset = 0x4, fixed_abs, tag = 'smem constant byte address 0x4 - core index']
  #allocation1 [shape = 'u32[144,128]{1,0:T(1,128)}', space=vmem, size = 0x12000, scoped, tag = 'internal scratch']
  %s0 = inlined_call_operand.vmem [shape: s32[8,1], index: 0, kind: input, shape index: {}]
  %s1 = inlined_call_operand.vmem [shape: f32[4,10], index: 1, kind: input, shape index: {}]
  %s2 = inlined_call_operand.hbm [shape: f32[8,1,10], index: 2, kind: output, shape index: {}]
  %s3 = sld [smem:[#allocation0]]
  $region18: #{tpu_custom_call.1} parent=0
    _
  %s5 = ssub.s32 1, %s3
  %s6 = scalar_select 0, %s5, %s3
  $region1: #{tpu_custom_call.1} parent=0
    #allocation2 [shape = 'u8[4096]{0}', space=vmem, size = 0x1000, scoped, tag = 'output window, operand 0, single buffered']
    #allocation3 [shape = 's32[1]{0}', space=sflag, size = 0x4, scoped, tag = 'scoped memory for tpu_custom_call.1']
    %7 = vsyncpa [#allocation3], 0
    // Predicated region
    $region2: #{tpu_custom_call.1} parent=1 // pred_check
      _
    $region3: #{tpu_custom_call.1} parent=1 // pred_check_branch
      %9 = sbr.rel (0) target = $region5
    $region4: #{tpu_custom_call.1} parent=1 // pred_region
      _
    $region5: #{tpu_custom_call.1} parent=1 // pred_fallthru
      _
    // Predicated region
    $region6: #{tpu_custom_call.1} parent=1 // pred_check
      _
    $region7: #{tpu_custom_call.1} parent=1 // pred_check_branch
      %11 = sbr.rel (0) target = $region9
    $region8: #{tpu_custom_call.1} parent=1 // pred_region
      _
    $region9: #{tpu_custom_call.1} parent=1 // pred_fallthru
      _
    %v12 = vld [vmem:[%s0] sm:$0xff]
    %v13 = vld [vmem:[%s1] sm:$0xf]
    %vm14 = vcmp.eq.s32.totalorder %v12, 0
    %v15 = vsel %vm14, 1, 0
    %16 = vset.pattern.permute.xlu0 0
    %17 = vperm.xlu0 %16, %v15
    %v18 = vpop.permute.xlu0 %17
    %vm19 = vcmp.eq.s32.totalorder %v18, 1
    %v20 = vlaneseq
    %v21 = vshrl.u32 %v20, 7
    %v22 = vsub.s32 0, %v21
    %v23 = vrot.slane %v13, %v22
    %v24 = vsel %vm19, %v23, 0.0
    %vm25 = vcmp.eq.s32.totalorder %v12, 1
    %v26 = vsel %vm25, 1, 0
    %27 = vset.pattern.permute.xlu0 0
    %28 = vperm.xlu0 %27, %v26
    %v29 = vpop.permute.xlu0 %28
    %vm30 = vcmp.eq.s32.totalorder %v29, 1
    %v31 = vlaneseq
    %v32 = vshrl.u32 %v31, 7
    %v33 = vsub.s32 1, %v32
    %v34 = vrot.slane %v13, %v33
    %v35 = vsel %vm30, %v34, %v24
    %vm36 = vcmp.eq.s32.totalorder %v12, 2
    %v37 = vsel %vm36, 1, 0
    %38 = vset.pattern.permute.xlu0 0
    %39 = vperm.xlu0 %38, %v37
    %v40 = vpop.permute.xlu0 %39
    %vm41 = vcmp.eq.s32.totalorder %v40, 1
    %v42 = vlaneseq
    %v43 = vshrl.u32 %v42, 7
    %v44 = vsub.s32 2, %v43
    %v45 = vrot.slane %v13, %v44
    %v46 = vsel %vm41, %v45, %v35
    %vm47 = vcmp.eq.s32.totalorder %v12, 3
    %v48 = vsel %vm47, 1, 0
    %49 = vset.pattern.permute.xlu0 0
    %50 = vperm.xlu0 %49, %v48
    %v51 = vpop.permute.xlu0 %50
    %vm52 = vcmp.eq.s32.totalorder %v51, 1
    %v53 = vlaneseq
    %v54 = vshrl.u32 %v53, 7
    %v55 = vsub.s32 3, %v54
    %v56 = vrot.slane %v13, %v55
    %v57 = vsel %vm52, %v56, %v46
    %v59 = vcombine.high %v57, %v57
    %v61 = vunpack.c.l.s4 1966171168
    %v62 = vunpack.c.0.s8 %v61
    %v63 = vlaneseq
    %v64 = vshrl.u32 %v63, 7
    %v65 = vsub.s32 %v62, %v64
    %v66 = vrot.slane %v57, %v65
    %v68 = vunpack.c.l.s4 1966171168
    %v69 = vunpack.c.0.s8 %v68
    %v70 = vlaneseq
    %v71 = vshrl.u32 %v70, 7
    %v72 = vsub.s32 %v69, %v71
    %v73 = vrot.slane %v59, %v72
    %v74 = vcombine.high %v66, %v66
    %v75 = vcombine.high %v73, %v73
    %v77 = vunpack.c.l.s4 1966171168
    %v78 = vunpack.c.0.s8 %v77
    %v79 = vlaneseq
    %v80 = vshrl.u32 %v79, 7
    %v81 = vsub.s32 %v78, %v80
    %v82 = vrot.slane %v66, %v81
    %v84 = vunpack.c.l.s4 1966171168
    %v85 = vunpack.c.0.s8 %v84
    %v86 = vlaneseq
    %v87 = vshrl.u32 %v86, 7
    %v88 = vsub.s32 %v85, %v87
    %v89 = vrot.slane %v73, %v88
    %v91 = vunpack.c.l.s4 1966171168
    %v92 = vunpack.c.0.s8 %v91
    %v93 = vlaneseq
    %v94 = vshrl.u32 %v93, 7
    %v95 = vsub.s32 %v92, %v94
    %v96 = vrot.slane %v74, %v95
    %v98 = vunpack.c.l.s4 1966171168
    %v99 = vunpack.c.0.s8 %v98
    %v100 = vlaneseq
    %v101 = vshrl.u32 %v100, 7
    %v102 = vsub.s32 %v99, %v101
    %v103 = vrot.slane %v75, %v102
    %v104 = vcombine.high %v82, %v82
    %v105 = vcombine.high %v89, %v89
    %v106 = vcombine.high %v96, %v96
    %v107 = vcombine.high %v103, %v103
    %vm116 = vcmask 73728
    %117 = vst.msk [vmem:[#allocation2] sm:$0x1] %vm116, %v82
    %118 = vst.msk [vmem:[#allocation2 + $0x1] sm:$0x1] %vm116, %v96
    %119 = vst.msk [vmem:[#allocation2 + $0x2] sm:$0x1] %vm116, %v104
    %120 = vst.msk [vmem:[#allocation2 + $0x3] sm:$0x1] %vm116, %v106
    %121 = vst.msk [vmem:[#allocation2 + $0x4] sm:$0x1] %vm116, %v89
    %122 = vst.msk [vmem:[#allocation2 + $0x5] sm:$0x1] %vm116, %v103
    %123 = vst.msk [vmem:[#allocation2 + $0x6] sm:$0x1] %vm116, %v105
    %124 = vst.msk [vmem:[#allocation2 + $0x7] sm:$0x1] %vm116, %v107
    // Predicated region
    $region10: #{tpu_custom_call.1} parent=1 // pred_check
      _
    $region11: #{tpu_custom_call.1} parent=1 // pred_check_branch
      %126 = sbr.rel (0) target = $region13
    $region12: #{tpu_custom_call.1} parent=1 // pred_region
      %s128 = ssub.s32 128, 128
      %129 = vsyncadd [#allocation3], %s128
      %s130 = sshll.u32 [#allocation2], 4
      %s131 = int_to_ptr.vmem [resolvable:$true] %s130
      %136 = dma.vmem_to_hbm [thread:$0]  %s131, 128, %s2, [#allocation3], 16, 16, 1
    $region13: #{tpu_custom_call.1} parent=1 // pred_fallthru
      _
    // Predicated region
    $region14: #{tpu_custom_call.1} parent=1 // pred_check
      _
    $region15: #{tpu_custom_call.1} parent=1 // pred_check_branch
      %138 = sbr.rel (0) target = $region17
    $region16: #{tpu_custom_call.1} parent=1 // pred_region
      %139 = dma.done [#allocation3], 128
    $region17: #{tpu_custom_call.1} parent=1 // pred_fallthru
      _
    %140 = vsyncpa [#allocation3], 1

</llo_original>
